<compile_context>
chip_gen: v7x
topology: tpu7x:2x2x1
jax: 0.10.0
libtpu: 0.0.40
codegen_flags: <defaults>
</compile_context>

<pallas_src>
import functools

import jax
import jax.numpy as jnp
from jax.experimental import pallas as pl
from jax.experimental.pallas import tpu as pltpu


def _ru(x, m):
    return ((x + m - 1) // m) * m


# ----------------------------------------------------------------------------
# Pallas kernels
# ----------------------------------------------------------------------------
def _mm_ep_kernel(a_ref, b_ref, s_ref, t_ref, o_ref, *, relu):
    """out = (A @ B) * scale + shift  [+ relu]   (A,B bf16, f32 accumulate)."""
    acc = jnp.dot(a_ref[...], b_ref[...], preferred_element_type=jnp.float32)
    acc = acc * s_ref[...] + t_ref[...]
    if relu:
        acc = jnp.maximum(acc, 0.0)
    o_ref[...] = acc


def _mm_ep_res_kernel(a_ref, b_ref, s_ref, t_ref, r_ref, o_ref, *, relu):
    """out = (A @ B) * scale + shift + residual  [+ relu]."""
    acc = jnp.dot(a_ref[...], b_ref[...], preferred_element_type=jnp.float32)
    acc = acc * s_ref[...] + t_ref[...] + r_ref[...]
    if relu:
        acc = jnp.maximum(acc, 0.0)
    o_ref[...] = acc


def _mm_ep_dual_kernel(a_ref, b_ref, s_ref, t_ref, r_ref, d_ref, o_ref):
    """d = (A @ B) * scale + shift ; out = relu(d + residual)   (BasicBlock1)."""
    acc = jnp.dot(a_ref[...], b_ref[...], preferred_element_type=jnp.float32)
    acc = acc * s_ref[...] + t_ref[...]
    d_ref[...] = acc
    o_ref[...] = jnp.maximum(acc + r_ref[...], 0.0)


def _matvec_kernel(a_ref, w_ref, t_ref, o_ref):
    """Cout=1 1x1 conv: out = sum_c a[:, c]*w[c] + shift (VPU mul + lane reduce)."""
    z = jnp.sum(a_ref[...] * w_ref[...], axis=-1, keepdims=True) + t_ref[...]
    o_ref[...] = z


def _gate_kernel(h_ref, w_ref, t_ref, f_ref, o_ref):
    """GSC gate: alpha = sigmoid(h @ w + shift) ; out = feat * (alpha + 1)."""
    z = jnp.sum(h_ref[...] * w_ref[...], axis=-1, keepdims=True) + t_ref[...]
    alpha = jax.nn.sigmoid(z)
    o_ref[...] = f_ref[...] * (alpha + 1.0)


# ----------------------------------------------------------------------------
# Cached pallas_call builders (one Mosaic compile per distinct shape bucket)
# ----------------------------------------------------------------------------
def _tile_m(m):
    return 256 if (m % 256 == 0 and m > 256) else m


@functools.lru_cache(maxsize=None)
def _mm_call(M, K, N, relu):
    TM = _tile_m(M)
    fn = pl.pallas_call(
        functools.partial(_mm_ep_kernel, relu=relu),
        out_shape=jax.ShapeDtypeStruct((M, N), jnp.float32),
        grid=(M // TM,),
        in_specs=[pl.BlockSpec((TM, K), lambda i: (i, 0)),
                  pl.BlockSpec((K, N), lambda i: (0, 0)),
                  pl.BlockSpec((1, N), lambda i: (0, 0)),
                  pl.BlockSpec((1, N), lambda i: (0, 0))],
        out_specs=pl.BlockSpec((TM, N), lambda i: (i, 0)),
        compiler_params=pltpu.CompilerParams(dimension_semantics=("parallel",)),
    )
    return jax.jit(fn)


@functools.lru_cache(maxsize=None)
def _mm_res_call(M, K, N, relu):
    TM = _tile_m(M)
    fn = pl.pallas_call(
        functools.partial(_mm_ep_res_kernel, relu=relu),
        out_shape=jax.ShapeDtypeStruct((M, N), jnp.float32),
        grid=(M // TM,),
        in_specs=[pl.BlockSpec((TM, K), lambda i: (i, 0)),
                  pl.BlockSpec((K, N), lambda i: (0, 0)),
                  pl.BlockSpec((1, N), lambda i: (0, 0)),
                  pl.BlockSpec((1, N), lambda i: (0, 0)),
                  pl.BlockSpec((TM, N), lambda i: (i, 0))],
        out_specs=pl.BlockSpec((TM, N), lambda i: (i, 0)),
        compiler_params=pltpu.CompilerParams(dimension_semantics=("parallel",)),
    )
    return jax.jit(fn)


@functools.lru_cache(maxsize=None)
def _mm_dual_call(M, K, N):
    TM = _tile_m(M)
    fn = pl.pallas_call(
        _mm_ep_dual_kernel,
        out_shape=(jax.ShapeDtypeStruct((M, N), jnp.float32),
                   jax.ShapeDtypeStruct((M, N), jnp.float32)),
        grid=(M // TM,),
        in_specs=[pl.BlockSpec((TM, K), lambda i: (i, 0)),
                  pl.BlockSpec((K, N), lambda i: (0, 0)),
                  pl.BlockSpec((1, N), lambda i: (0, 0)),
                  pl.BlockSpec((1, N), lambda i: (0, 0)),
                  pl.BlockSpec((TM, N), lambda i: (i, 0))],
        out_specs=(pl.BlockSpec((TM, N), lambda i: (i, 0)),
                   pl.BlockSpec((TM, N), lambda i: (i, 0))),
        compiler_params=pltpu.CompilerParams(dimension_semantics=("parallel",)),
    )
    return jax.jit(fn)


@functools.lru_cache(maxsize=None)
def _matvec_call(M, K):
    fn = pl.pallas_call(
        _matvec_kernel,
        out_shape=jax.ShapeDtypeStruct((M, 1), jnp.float32),
        grid=(1,),
        in_specs=[pl.BlockSpec((M, K), lambda i: (0, 0)),
                  pl.BlockSpec((1, K), lambda i: (0, 0)),
                  pl.BlockSpec((1, 1), lambda i: (0, 0))],
        out_specs=pl.BlockSpec((M, 1), lambda i: (0, 0)),
        compiler_params=pltpu.CompilerParams(dimension_semantics=("arbitrary",)),
    )
    return jax.jit(fn)


@functools.lru_cache(maxsize=None)
def _gate_call(M, Kg, C):
    fn = pl.pallas_call(
        _gate_kernel,
        out_shape=jax.ShapeDtypeStruct((M, C), jnp.float32),
        grid=(1,),
        in_specs=[pl.BlockSpec((M, Kg), lambda i: (0, 0)),
                  pl.BlockSpec((1, Kg), lambda i: (0, 0)),
                  pl.BlockSpec((1, 1), lambda i: (0, 0)),
                  pl.BlockSpec((M, C), lambda i: (0, 0))],
        out_specs=pl.BlockSpec((M, C), lambda i: (0, 0)),
        compiler_params=pltpu.CompilerParams(dimension_semantics=("arbitrary",)),
    )
    return jax.jit(fn)


# ----------------------------------------------------------------------------
# Fused conv ops (im2col in JAX, everything else inside the Pallas kernel)
# ----------------------------------------------------------------------------
def _im2col(x, kh, kw, stride, pad):
    N, H, W, C = x.shape
    if kh == 1 and kw == 1 and stride == 1 and pad == 0:
        return x.reshape(N * H * W, C), (N, H, W)
    xp = jnp.pad(x, ((0, 0), (pad, pad), (pad, pad), (0, 0))) if pad else x
    Ho = (H + 2 * pad - kh) // stride + 1
    Wo = (W + 2 * pad - kw) // stride + 1
    cols = []
    for dy in range(kh):
        for dx in range(kw):
            cols.append(xp[:, dy:dy + stride * Ho:stride, dx:dx + stride * Wo:stride, :])
    patches = jnp.concatenate(cols, axis=-1)             # (N, Ho, Wo, kh*kw*C)
    return patches.reshape(N * Ho * Wo, kh * kw * C), (N, Ho, Wo)


def fused_conv(x, fp, residual=None, dual=False):
    """Conv (+bias+BN+ReLU [+ residual add & ReLU]) as one fused Pallas MXU matmul."""
    patches, (N, Ho, Wo) = _im2col(x, fp['k'], fp['k'], fp['stride'], fp['pad'])
    M, K = patches.shape
    Kp, Cout = fp['wm'].shape
    Mp = max(8, _ru(M, 8))
    a = patches.astype(jnp.bfloat16)
    if (Mp, Kp) != (M, K):
        a = jnp.pad(a, ((0, Mp - M), (0, Kp - K)))

    if residual is None:
        out = _mm_call(Mp, Kp, Cout, fp['relu'])(a, fp['wm'], fp['scale'], fp['shift'])
        return out[:M].reshape(N, Ho, Wo, Cout)

    r = residual.reshape(-1, Cout)
    if Mp != M:
        r = jnp.pad(r, ((0, Mp - M), (0, 0)))
    if dual:
        d, o = _mm_dual_call(Mp, Kp, Cout)(a, fp['wm'], fp['scale'], fp['shift'], r)
        return (d[:M].reshape(N, Ho, Wo, Cout), o[:M].reshape(N, Ho, Wo, Cout))
    out = _mm_res_call(Mp, Kp, Cout, fp['relu'])(a, fp['wm'], fp['scale'], fp['shift'], r)
    return out[:M].reshape(N, Ho, Wo, Cout)


def fused_deconv(x, fp):
    """ConvTranspose2d: zero-dilate the input, then run the precomputed equivalent conv."""
    s = fp['up_stride']
    N, H, W, C = x.shape
    xd = jnp.zeros((N, (H - 1) * s + 1, (W - 1) * s + 1, C), x.dtype)
    xd = xd.at[:, ::s, ::s, :].set(x)
    return fused_conv(xd, fp)


def conv_to1(x, vp):
    """1x1 conv with a single output channel (dsn heads / fuse / FCN-head 1x1)."""
    N, H, W, C = x.shape
    M = N * H * W
    a = x.reshape(M, C)
    Mp = max(8, _ru(M, 8))
    if Mp != M:
        a = jnp.pad(a, ((0, Mp - M), (0, 0)))
    out = _matvec_call(Mp, C)(a, vp['w'], vp['shift'])
    return out[:M].reshape(N, H, W, 1)


def gsc_gate(h, feat, gp):
    """Fused: alpha = sigmoid(BN(1x1(h))) ; return feat * (alpha + 1)."""
    N, H, W, Cg = h.shape
    C = feat.shape[-1]
    M = N * H * W
    Mp = max(8, _ru(M, 8))
    hf, ff = h.reshape(M, Cg), feat.reshape(M, C)
    if Mp != M:
        hf = jnp.pad(hf, ((0, Mp - M), (0, 0)))
        ff = jnp.pad(ff, ((0, Mp - M), (0, 0)))
    out = _gate_call(Mp, Cg, C)(hf, gp['w'], gp['shift'], ff)
    return out[:M].reshape(N, H, W, C)


# ----------------------------------------------------------------------------
# Plain-JAX glue
# ----------------------------------------------------------------------------
def maxpool2d(x, k=3, stride=2, pad=1):
    N, H, W, C = x.shape
    xp = jnp.pad(x, ((0, 0), (pad, pad), (pad, pad), (0, 0)), constant_values=-jnp.inf)
    Ho = (H + 2 * pad - k) // stride + 1
    Wo = (W + 2 * pad - k) // stride + 1
    out = None
    for dy in range(k):
        for dx in range(k):
            sl = xp[:, dy:dy + stride * Ho:stride, dx:dx + stride * Wo:stride, :]
            out = sl if out is None else jnp.maximum(out, sl)
    return out


def _resize_coords(out_size, in_size, align_corners):
    idx = jnp.arange(out_size, dtype=jnp.float32)
    if align_corners:
        if out_size == 1:
            src = jnp.zeros((out_size,), jnp.float32)
        else:
            src = idx * (in_size - 1) / (out_size - 1)
    else:
        src = (idx + 0.5) * (in_size / out_size) - 0.5
        src = jnp.clip(src, 0.0, in_size - 1)
    lo = jnp.clip(jnp.floor(src).astype(jnp.int32), 0, in_size - 1)
    hi = jnp.clip(lo + 1, 0, in_size - 1)
    frac = src - lo.astype(jnp.float32)
    return lo, hi, frac


def bilinear_resize(x, oh, ow, align_corners):
    """F.interpolate(..., mode='bilinear') on NHWC tensors (plain-JAX glue)."""
    N, H, W, C = x.shape
    h0, h1, fh = _resize_coords(oh, H, align_corners)
    w0, w1, fw = _resize_coords(ow, W, align_corners)
    rows = (x[:, h0, :, :] * (1.0 - fh)[None, :, None, None]
            + x[:, h1, :, :] * fh[None, :, None, None])
    out = (rows[:, :, w0, :] * (1.0 - fw)[None, None, :, None]
           + rows[:, :, w1, :] * fw[None, None, :, None])
    return out


# ----------------------------------------------------------------------------
# Deterministic parameter construction (weights pre-transformed / pre-fused)
# ----------------------------------------------------------------------------
class KeyGen:
    def __init__(self, key):
        self.key = key

    def __call__(self):
        self.key, k = jax.random.split(self.key)
        return k


def _conv_w(kg, cout, cin, k):
    std = (2.0 / (cin * k * k)) ** 0.5
    return std * jax.random.normal(kg(), (cout, cin, k, k), jnp.float32)


def _bias(kg, c):
    return 0.01 * jax.random.normal(kg(), (c,), jnp.float32)


def _bn_raw(kg, c):
    return {'gamma': 1.0 + 0.1 * jax.random.normal(kg(), (c,), jnp.float32),
            'beta': 0.1 * jax.random.normal(kg(), (c,), jnp.float32),
            'mean': 0.1 * jax.random.normal(kg(), (c,), jnp.float32),
            'var': 1.0 + jnp.abs(0.1 * jax.random.normal(kg(), (c,), jnp.float32))}


def _bn_affine(bn, eps=1e-5):
    scale = bn['gamma'] * jax.lax.rsqrt(bn['var'] + eps)
    shift = bn['beta'] - bn['mean'] * scale
    return scale, shift


def _fuse(w, bias, bn, stride, pad, relu, up_stride=None):
    """Build-time transform: (Cout,Cin,kh,kw) -> padded bf16 (K,Cout) + f32 scale/shift."""
    cout, cin, kh, kw = w.shape
    K = kh * kw * cin
    Kp = _ru(K, 128)
    wm = jnp.transpose(w, (2, 3, 1, 0)).reshape(K, cout)
    wm = jnp.pad(wm, ((0, Kp - K), (0, 0))).astype(jnp.bfloat16)
    if bn is not None:
        scale, shift = _bn_affine(bn)
    else:
        scale = jnp.ones((cout,), jnp.float32)
        shift = jnp.zeros((cout,), jnp.float32)
    if bias is not None:
        shift = shift + scale * bias
    fp = {'wm': wm, 'scale': scale.reshape(1, cout), 'shift': shift.reshape(1, cout),
          'k': kh, 'stride': stride, 'pad': pad, 'relu': relu}
    if up_stride is not None:
        fp['up_stride'] = up_stride
    return fp


def conv_bn(kg, cin, cout, k, stride, pad, relu, bias=False):
    w = _conv_w(kg, cout, cin, k)
    b = _bias(kg, cout) if bias else None
    return _fuse(w, b, _bn_raw(kg, cout), stride, pad, relu)


def conv_plain(kg, cin, cout, k, stride, pad, relu=False, bias=True):
    w = _conv_w(kg, cout, cin, k)
    b = _bias(kg, cout) if bias else None
    return _fuse(w, b, None, stride, pad, relu)


def make_deconv(kg, cin, cout, k=4, stride=2, pad=1):
    std = (2.0 / (cin * k * k)) ** 0.5
    w = std * jax.random.normal(kg(), (cin, cout, k, k), jnp.float32)   # torch layout
    b = _bias(kg, cout)
    w_eq = jnp.transpose(w[:, :, ::-1, ::-1], (1, 0, 2, 3))             # (Cout,Cin,k,k)
    return _fuse(w_eq, b, None, stride=1, pad=k - 1 - pad, relu=False, up_stride=stride)


def make_conv_to1(kg, cin, bias=True):
    w = _conv_w(kg, 1, cin, 1)
    b = _bias(kg, 1) if bias else jnp.zeros((1,), jnp.float32)
    return {'w': w.reshape(1, cin), 'shift': b.reshape(1, 1)}


# ------------------------------- ResidualBlock -------------------------------
def make_residual_block(kg, cin, cout, stride, downsample):
    return {'c1': conv_bn(kg, cin, cout, 3, stride, 1, relu=True),
            'c2': conv_bn(kg, cout, cout, 3, 1, 1, relu=True),   # relu after residual add
            'down': conv_bn(kg, cin, cout, 1, stride, 0, relu=False) if downsample else None}


def residual_block_fwd(p, x):
    y = fused_conv(x, p['c1'])
    r = x if p['down'] is None else fused_conv(x, p['down'])
    return fused_conv(y, p['c2'], residual=r)           # relu(bn2(conv2(y)) + r)


def make_layer(kg, block_num, cin, cout, stride):
    downsample = (cin != cout) or (stride != 1)
    blocks = [make_residual_block(kg, cin, cout, stride, downsample)]
    for _ in range(block_num - 1):
        blocks.append(make_residual_block(kg, cout, cout, 1, False))
    return blocks


def layer_fwd(blocks, x):
    for b in blocks:
        x = residual_block_fwd(b, x)
    return x


# ------------------------------ Resnet.BasicBlock1 ---------------------------
def make_basicblock1(kg, cin, cout):
    return {'c1': conv_bn(kg, cin, cout, 3, 1, 1, relu=True),
            'c2': conv_bn(kg, cout, cout, 3, 1, 1, relu=False)}


def basicblock1_fwd(p, x, need_out=True):
    # TODO(synk): Resnet.BasicBlock1 source not included in the snippet; assumed it
    # returns (relu(x + F(x)), F(x)), matching how TFD consumes (u_1, delta_u_0).
    h = fused_conv(x, p['c1'])
    if need_out:
        delta, out = fused_conv(h, p['c2'], residual=x, dual=True)
        return out, delta
    return None, fused_conv(h, p['c2'])


# --------------------------- gsc.GatedSpatialConv2d --------------------------
def make_gsc(kg, cin, cout):
    cg = cin + 1
    bn1 = _bn_raw(kg, cg)
    w1 = _conv_w(kg, cg, cg, 1)
    b1 = _bias(kg, cg)
    w2 = _conv_w(kg, 1, cg, 1)
    b2 = _bias(kg, 1)
    bn2 = _bn_raw(kg, 1)
    wc = _conv_w(kg, cout, cin, 1)
    # Fold the leading BN(cin+1) into the 1x1 gate conv (kernel=1, pad=0 -> exact).
    a1, c1 = _bn_affine(bn1)
    w1f = w1 * a1[None, :, None, None]
    b1f = b1 + jnp.einsum('oi,i->o', w1[:, :, 0, 0], c1)
    # Fold BN(1) after the second 1x1 into the gate weight vector / shift.
    a2, c2 = _bn_affine(bn2)
    gate_w = (a2[:, None] * w2[:, :, 0, 0]).reshape(1, cg)
    gate_t = (a2 * b2 + c2).reshape(1, 1)
    return {'g1': _fuse(w1f, b1f, None, 1, 0, relu=True),
            'gate': {'w': gate_w, 'shift': gate_t},
            'conv': _fuse(wc, None, None, 1, 0, relu=False)}


def gsc_fwd(p, feat, gate_in, residual):
    """GSCNN GatedSpatialConv2d, with the TFD combine fused into the final 1x1 epilogue."""
    x = jnp.concatenate([feat, gate_in], axis=-1)
    h = fused_conv(x, p['g1'])                        # folded BN + 1x1 + ReLU
    gated = gsc_gate(h, feat, p['gate'])              # 1x1->1, BN, sigmoid, feat*(alpha+1)
    return fused_conv(gated, p['conv'], residual=residual)


# ------------------------------------ TFD ------------------------------------
def make_tfd(kg, cin, cout):
    return {'res1': make_basicblock1(kg, cin, cout),
            'res2': make_basicblock1(kg, cin, cout),
            'gate': make_gsc(kg, cin, cout)}


def tfd_fwd(p, x, fx):
    u1, du0 = basicblock1_fwd(p['res1'], x, need_out=True)
    _, u2 = basicblock1_fwd(p['res2'], u1, need_out=False)
    comb = 3.0 * du0 + u2                             # tiny plain-JAX elementwise
    return gsc_fwd(p['gate'], u2, fx, residual=comb)  # u3 = u3_pre + 3*du0 + u2


# ---------------------------------- _FCNHead ---------------------------------
def make_fcnhead(kg, cin):
    inter = cin // 4
    return {'c1': conv_bn(kg, cin, inter, 3, 1, 1, relu=True),
            'c2': make_conv_to1(kg, inter, bias=True)}


def fcnhead_fwd(p, x):
    x = fused_conv(x, p['c1'])
    # Dropout(0.1): inference mode -> identity
    return conv_to1(x, p['c2'])


# ------------------------------------ TTOA -----------------------------------
def make_ttoa(kg, c):
    # TODO(synk): TTOA module source not included in the snippet; shape-preserving
    # gated fusion (sigmoid(1x1(low)) * high + low) kept as a stand-in.
    return {'conv': conv_plain(kg, c, c, 1, 1, 0, relu=False, bias=True)}


def ttoa_fwd(p, low, high):
    a = jax.nn.sigmoid(fused_conv(low, p['conv']))
    return a * high + low


# ------------------------------------ stem -----------------------------------
def make_stem(kg, stem_w):
    bn0 = _bn_raw(kg, 3)
    s0, t0 = _bn_affine(bn0)
    return {'bn0_scale': s0, 'bn0_shift': t0,
            'c1': conv_bn(kg, 3, stem_w, 3, 2, 1, relu=True),
            'c2': conv_bn(kg, stem_w, stem_w, 3, 1, 1, relu=True),
            'c3': conv_bn(kg, stem_w, 2 * stem_w, 3, 1, 1, relu=True)}


def stem_fwd(p, x):
    # BN on the 3-channel input stays plain JAX (cannot be folded into conv1 because
    # of the zero padding; tiny anyway).
    x = x * p['bn0_scale'][None, None, None, :] + p['bn0_shift'][None, None, None, :]
    x = fused_conv(x, p['c1'])
    x = fused_conv(x, p['c2'])
    x = fused_conv(x, p['c3'])
    return maxpool2d(x, 3, 2, 1)


# ------------------------------------ ISNet ----------------------------------
def make_isnet(kg, layer_blocks=(4, 4, 4), channels=(8, 16, 32, 64)):
    c = channels
    p = {}
    p['stem'] = make_stem(kg, c[0])
    p['ttoa_low'] = make_ttoa(kg, c[2])
    p['ttoa_high'] = make_ttoa(kg, c[1])
    p['layer1'] = make_layer(kg, layer_blocks[0], c[1], c[1], 1)
    p['layer2'] = make_layer(kg, layer_blocks[1], c[1], c[2], 2)
    p['layer3'] = make_layer(kg, layer_blocks[2], c[2], c[3], 2)
    p['deconv2'] = make_deconv(kg, c[3], c[2], 4, 2, 1)
    p['uplayer2'] = make_layer(kg, layer_blocks[1], c[2], c[2], 1)
    p['deconv1'] = make_deconv(kg, c[2], c[1], 4, 2, 1)
    p['uplayer1'] = make_layer(kg, layer_blocks[0], c[1], c[1], 1)
    p['head'] = make_fcnhead(kg, c[1])
    p['dsn1'] = make_conv_to1(kg, 64, bias=True)
    p['dsn2'] = make_conv_to1(kg, 32, bias=True)
    p['dsn3'] = make_conv_to1(kg, 16, bias=True)
    p['fuse'] = make_conv_to1(kg, 64, bias=False)
    p['dsup'] = conv_plain(kg, 3, 64, 1, 1, 0, relu=False, bias=True)
    p['myb1'] = make_tfd(kg, 64, 64)
    p['myb2'] = make_tfd(kg, 64, 64)
    p['myb3'] = make_tfd(kg, 64, 64)
    # (modules never used in forward — SA, gate1-3, res1-3, d1-3, cw, head2, conv2_1,
    #  conv16 — are intentionally not instantiated)
    return p


def isnet_forward(p, x_nchw, xgrad_nchw):
    x = jnp.transpose(x_nchw, (0, 2, 3, 1)).astype(jnp.float32)    # NHWC
    xg = jnp.transpose(xgrad_nchw, (0, 2, 3, 1)).astype(jnp.float32)
    _, hei, wid, _ = x.shape

    x1 = stem_fwd(p['stem'], x)
    c1 = layer_fwd(p['layer1'], x1)
    c2 = layer_fwd(p['layer2'], c1)
    c3 = layer_fwd(p['layer3'], c2)

    deconc2 = fused_deconv(c3, p['deconv2'])
    fusec2 = ttoa_fwd(p['ttoa_low'], deconc2, c2)
    upc2 = layer_fwd(p['uplayer2'], fusec2)

    deconc1 = fused_deconv(upc2, p['deconv1'])
    fusec1 = ttoa_fwd(p['ttoa_high'], deconc1, c1)
    upc1 = layer_fwd(p['uplayer1'], fusec1)

    s1 = bilinear_resize(conv_to1(c3, p['dsn1']), hei, wid, True)
    s2 = bilinear_resize(conv_to1(upc2, p['dsn2']), hei, wid, True)
    s3 = bilinear_resize(conv_to1(upc1, p['dsn3']), hei, wid, True)

    m1f = bilinear_resize(xg, hei, wid, True)
    m1f = fused_conv(m1f, p['dsup'])

    cs1 = tfd_fwd(p['myb1'], m1f, s1)
    cs2 = tfd_fwd(p['myb2'], cs1, s2)
    cs = tfd_fwd(p['myb3'], cs2, s3)
    cs = conv_to1(cs, p['fuse'])
    cs = bilinear_resize(cs, hei, wid, True)
    edge_out = jax.nn.sigmoid(cs)

    upc1_up = bilinear_resize(upc1, hei, wid, False)        # align_corners default
    fuse = edge_out * upc1_up + upc1_up
    pred = fcnhead_fwd(p['head'], fuse)
    out = bilinear_resize(pred, hei, wid, False)

    return (jnp.transpose(out, (0, 3, 1, 2)),        # (N, 1, H, W)
            jnp.transpose(edge_out, (0, 3, 1, 2)))   # (N, 1, H, W)


# ----------------------------------------------------------------------------
if __name__ == "__main__":
    key = jax.random.PRNGKey(0)
    k_x, k_g = jax.random.split(key)
    # ISNet(layer_blocks=[4,4,4], channels=[8,16,32,64]); small spatial size 16x16.
    x = jax.random.normal(k_x, (2, 3, 16, 16), jnp.float32)
    x_grad = jax.random.normal(k_g, (2, 3, 16, 16), jnp.float32)

    params = make_isnet(KeyGen(jax.random.PRNGKey(42)))

    out, edge_out = isnet_forward(params, x, x_grad)
    out = jax.block_until_ready(out)
    edge_out = jax.block_until_ready(edge_out)

    assert out.shape == (2, 1, 16, 16) and edge_out.shape == (2, 1, 16, 16)
    assert jnp.all(jnp.isfinite(out)) and jnp.all(jnp.isfinite(edge_out))
    print("KERNEL_OK")
</pallas_src>

<mosaic_0001>
module attributes {stable_mosaic.version = 11 : i64} {
  func.func @_mm_ep_kernel(%arg0: i32, %arg1: memref<128x128xbf16, #tpu.memory_space<vmem>>, %arg2: memref<128x8xbf16, #tpu.memory_space<vmem>>, %arg3: memref<1x8xf32, #tpu.memory_space<vmem>>, %arg4: memref<1x8xf32, #tpu.memory_space<vmem>>, %arg5: memref<128x8xf32, #tpu.memory_space<vmem>>) attributes {dimension_semantics = [#tpu.dimension_semantics<parallel>], iteration_bounds = array<i64: 1>, scalar_prefetch = 0 : i64, scratch_operands = 0 : i64, tpu.core_type = #tpu.core_type<tc>, window_params = [{transform_indices = @transform_0, window_bounds = array<i64: 128, 128>}, {pipeline_mode = #tpu.pipeline_mode<synchronous>, transform_indices = @transform_1, window_bounds = array<i64: 128, 8>}, {pipeline_mode = #tpu.pipeline_mode<synchronous>, transform_indices = @transform_2, window_bounds = array<i64: 1, 8>}, {pipeline_mode = #tpu.pipeline_mode<synchronous>, transform_indices = @transform_3, window_bounds = array<i64: 1, 8>}, {transform_indices = @transform_4, window_bounds = array<i64: 128, 8>}]} {
    %c0 = arith.constant 0 : index
    %c0_0 = arith.constant 0 : index
    %0 = vector.load %arg1[%c0, %c0_0] : memref<128x128xbf16, #tpu.memory_space<vmem>>, vector<128x128xbf16>
    %c0_1 = arith.constant 0 : index
    %c0_2 = arith.constant 0 : index
    %1 = vector.load %arg2[%c0_1, %c0_2] : memref<128x8xbf16, #tpu.memory_space<vmem>>, vector<128x8xbf16>
    %cst = arith.constant dense<0.000000e+00> : vector<128x8xf32>
    %2 = tpu.matmul %0, %1, %cst {dimension_numbers = #tpu.dot_dimension_numbers<[1], [0], [0], [1], [0, 0, 1, 1], [], []>} : vector<128x128xbf16>, vector<128x8xbf16>, vector<128x8xf32> -> vector<128x8xf32>
    %c0_3 = arith.constant 0 : index
    %c0_4 = arith.constant 0 : index
    %3 = vector.load %arg3[%c0_3, %c0_4] : memref<1x8xf32, #tpu.memory_space<vmem>>, vector<1x8xf32>
    %4 = vector.broadcast %3 : vector<1x8xf32> to vector<128x8xf32>
    %5 = arith.mulf %2, %4 : vector<128x8xf32>
    %c0_5 = arith.constant 0 : index
    %c0_6 = arith.constant 0 : index
    %6 = vector.load %arg4[%c0_5, %c0_6] : memref<1x8xf32, #tpu.memory_space<vmem>>, vector<1x8xf32>
    %7 = vector.broadcast %6 : vector<1x8xf32> to vector<128x8xf32>
    %8 = arith.addf %5, %7 : vector<128x8xf32>
    %cst_7 = arith.constant 0.000000e+00 : f32
    %9 = vector.broadcast %cst_7 : f32 to vector<128x8xf32>
    %10 = arith.maximumf %8, %9 : vector<128x8xf32>
    %c0_8 = arith.constant 0 : index
    %c0_9 = arith.constant 0 : index
    %11 = vector.load %arg5[%c0_8, %c0_9] : memref<128x8xf32, #tpu.memory_space<vmem>>, vector<128x8xf32>
    tpu.vector_store %arg5[%c0_8, %c0_9], %10 {strides = array<i32>} : memref<128x8xf32, #tpu.memory_space<vmem>>, vector<128x8xf32>,
    return
  }
  func.func @transform_0(%arg0: i32) -> (i32, i32) {
    %c0_i32 = arith.constant 0 : i32
    %c0_i32_0 = arith.constant 0 : i32
    return %arg0, %c0_i32 : i32, i32
  }
  func.func @transform_1(%arg0: i32) -> (i32, i32) {
    %c0_i32 = arith.constant 0 : i32
    %c0_i32_0 = arith.constant 0 : i32
    %c0_i32_1 = arith.constant 0 : i32
    return %c0_i32, %c0_i32_0 : i32, i32
  }
  func.func @transform_2(%arg0: i32) -> (i32, i32) {
    %c0_i32 = arith.constant 0 : i32
    %c0_i32_0 = arith.constant 0 : i32
    %c0_i32_1 = arith.constant 0 : i32
    return %c0_i32, %c0_i32_0 : i32, i32
  }
  func.func @transform_3(%arg0: i32) -> (i32, i32) {
    %c0_i32 = arith.constant 0 : i32
    %c0_i32_0 = arith.constant 0 : i32
    %c0_i32_1 = arith.constant 0 : i32
    return %c0_i32, %c0_i32_0 : i32, i32
  }
  func.func @transform_4(%arg0: i32) -> (i32, i32) {
    %c0_i32 = arith.constant 0 : i32
    %c0_i32_0 = arith.constant 0 : i32
    return %arg0, %c0_i32 : i32, i32
  }
}

</mosaic_0001>

<llo_original>
// kernel: tpu_custom_call.1
$region0: #{tpu_custom_call.1}
  #allocation0 [shape = 'u32[]', space=smem, size = 0x4, offset = 0x4, fixed_abs, tag = 'smem constant byte address 0x4 - core index']
  #allocation1 [shape = 'u32[144,128]{1,0:T(1,128)}', space=vmem, size = 0x12000, scoped, tag = 'internal scratch']
  %s0 = inlined_call_operand.vmem [shape: bf16[128,128], index: 0, kind: input, shape index: {}]
  %s1 = inlined_call_operand.vmem [shape: bf16[128,8], index: 1, kind: input, shape index: {}]
  %s2 = inlined_call_operand.vmem [shape: f32[1,8], index: 2, kind: input, shape index: {}]
  %s3 = inlined_call_operand.vmem [shape: f32[1,8], index: 3, kind: input, shape index: {}]
  %s4 = inlined_call_operand.vmem [shape: f32[128,8], index: 4, kind: output, shape index: {}]
  %s5 = sld [smem:[#allocation0]]
  $region26: #{tpu_custom_call.1} parent=0
    _
  %s7 = ssub.s32 1, %s5
  %s8 = scalar_select 0, %s7, %s5
  // Predicated region
  $region2: #{tpu_custom_call.1} parent=0 // pred_check
    _
  $region3: #{tpu_custom_call.1} parent=0 // pred_check_branch
    %10 = sbr.rel (0) target = $region5
  $region4: #{tpu_custom_call.1} parent=0 // pred_region
    _
  $region5: #{tpu_custom_call.1} parent=0 // pred_fallthru
    _
  // Predicated region
  $region6: #{tpu_custom_call.1} parent=0 // pred_check
    _
  $region7: #{tpu_custom_call.1} parent=0 // pred_check_branch
    %12 = sbr.rel (0) target = $region9
  $region8: #{tpu_custom_call.1} parent=0 // pred_region
    _
  $region9: #{tpu_custom_call.1} parent=0 // pred_fallthru
    _
  // Predicated region
  $region10: #{tpu_custom_call.1} parent=0 // pred_check
    _
  $region11: #{tpu_custom_call.1} parent=0 // pred_check_branch
    %14 = sbr.rel (0) target = $region13
  $region12: #{tpu_custom_call.1} parent=0 // pred_region
    _
  $region13: #{tpu_custom_call.1} parent=0 // pred_fallthru
    _
  // Predicated region
  $region14: #{tpu_custom_call.1} parent=0 // pred_check
    _
  $region15: #{tpu_custom_call.1} parent=0 // pred_check_branch
    %16 = sbr.rel (0) target = $region17
  $region16: #{tpu_custom_call.1} parent=0 // pred_region
    _
  $region17: #{tpu_custom_call.1} parent=0 // pred_fallthru
    _
  %v18 = vld [vmem:[%s0] sm:$0xf]
  %v19 = vld [vmem:[%s0 + $0x4] sm:$0xf]
  %v20 = vld [vmem:[%s0 + $0x8] sm:$0xf]
  %v21 = vld [vmem:[%s0 + $0xc] sm:$0xf]
  %v22 = vld [vmem:[%s0 + $0x10] sm:$0xf]
  %v23 = vld [vmem:[%s0 + $0x14] sm:$0xf]
  %v24 = vld [vmem:[%s0 + $0x18] sm:$0xf]
  %v25 = vld [vmem:[%s0 + $0x1c] sm:$0xf]
  %v26 = vld [vmem:[%s0 + $0x20] sm:$0xf]
  %v27 = vld [vmem:[%s0 + $0x24] sm:$0xf]
  %v28 = vld [vmem:[%s0 + $0x28] sm:$0xf]
  %v29 = vld [vmem:[%s0 + $0x2c] sm:$0xf]
  %v30 = vld [vmem:[%s0 + $0x30] sm:$0xf]
  %v31 = vld [vmem:[%s0 + $0x34] sm:$0xf]
  %v32 = vld [vmem:[%s0 + $0x38] sm:$0xf]
  %v33 = vld [vmem:[%s0 + $0x3c] sm:$0xf]
  %v34 = vld [vmem:[%s1] sm:$0xf]
  %v35 = vld [vmem:[%s1 + $0x4] sm:$0xf]
  %v36 = vld [vmem:[%s1 + $0x8] sm:$0xf]
  %v37 = vld [vmem:[%s1 + $0xc] sm:$0xf]
  %v38 = vld [vmem:[%s1 + $0x10] sm:$0xf]
  %v39 = vld [vmem:[%s1 + $0x14] sm:$0xf]
  %v40 = vld [vmem:[%s1 + $0x18] sm:$0xf]
  %v41 = vld [vmem:[%s1 + $0x1c] sm:$0xf]
  %v42 = vld [vmem:[%s1 + $0x20] sm:$0xf]
  %v43 = vld [vmem:[%s1 + $0x24] sm:$0xf]
  %v44 = vld [vmem:[%s1 + $0x28] sm:$0xf]
  %v45 = vld [vmem:[%s1 + $0x2c] sm:$0xf]
  %v46 = vld [vmem:[%s1 + $0x30] sm:$0xf]
  %v47 = vld [vmem:[%s1 + $0x34] sm:$0xf]
  %v48 = vld [vmem:[%s1 + $0x38] sm:$0xf]
  %v49 = vld [vmem:[%s1 + $0x3c] sm:$0xf]
  %v66 = vunpack.c.l.b16 %v18
  %v67 = vunpack.c.l.b16 %v19
  %v68 = vunpack.c.l.b16 %v20
  %v69 = vunpack.c.l.b16 %v21
  %v70 = vunpack.c.l.b16 %v22
  %v71 = vunpack.c.l.b16 %v23
  %v72 = vunpack.c.l.b16 %v24
  %v73 = vunpack.c.l.b16 %v25
  %v74 = vunpack.c.l.b16 %v26
  %v75 = vunpack.c.l.b16 %v27
  %v76 = vunpack.c.l.b16 %v28
  %v77 = vunpack.c.l.b16 %v29
  %v78 = vunpack.c.l.b16 %v30
  %v79 = vunpack.c.l.b16 %v31
  %v80 = vunpack.c.l.b16 %v32
  %v81 = vunpack.c.l.b16 %v33
  %v82 = vpack.c.b16 %v67, %v66
  %v83 = vpack.c.b16 %v69, %v68
  %v84 = vpack.c.b16 %v71, %v70
  %v85 = vpack.c.b16 %v73, %v72
  %v86 = vpack.c.b16 %v75, %v74
  %v87 = vpack.c.b16 %v77, %v76
  %v88 = vpack.c.b16 %v79, %v78
  %v89 = vpack.c.b16 %v81, %v80
  %v114 = vunpack.c.l.b16 %v34
  %v115 = vunpack.c.l.b16 %v35
  %v116 = vunpack.c.l.b16 %v36
  %v117 = vunpack.c.l.b16 %v37
  %v118 = vunpack.c.l.b16 %v38
  %v119 = vunpack.c.l.b16 %v39
  %v120 = vunpack.c.l.b16 %v40
  %v121 = vunpack.c.l.b16 %v41
  %v122 = vunpack.c.l.b16 %v42
  %v123 = vunpack.c.l.b16 %v43
  %v124 = vunpack.c.l.b16 %v44
  %v125 = vunpack.c.l.b16 %v45
  %v126 = vunpack.c.l.b16 %v46
  %v127 = vunpack.c.l.b16 %v47
  %v128 = vunpack.c.l.b16 %v48
  %v129 = vunpack.c.l.b16 %v49
  %v130 = vpack.c.b16 %v115, %v114
  %v131 = vpack.c.b16 %v117, %v116
  %v132 = vpack.c.b16 %v119, %v118
  %v133 = vpack.c.b16 %v121, %v120
  %v134 = vpack.c.b16 %v123, %v122
  %v135 = vpack.c.b16 %v125, %v124
  %v136 = vpack.c.b16 %v127, %v126
  %v137 = vpack.c.b16 %v129, %v128
  %146 = vmatprep.subr.bf16.mxu0 0
  %147 = vmatpush1.bf16.msra.mxu0 %v130
  %148 = vmatprep.subr.bf16.mxu0 0
  %149 = vmatpush1.bf16.msra.mxu0 %v131
  %150 = vmatprep.subr.bf16.mxu0 0
  %151 = vmatpush1.bf16.msra.mxu0 %v132
  %152 = vmatprep.subr.bf16.mxu0 0
  %153 = vmatpush1.bf16.msra.mxu0 %v133
  %154 = vmatprep.subr.bf16.mxu0 0
  %155 = vmatpush1.bf16.msra.mxu0 %v134
  %156 = vmatprep.subr.bf16.mxu0 0
  %157 = vmatpush1.bf16.msra.mxu0 %v135
  %158 = vmatprep.subr.bf16.mxu0 0
  %159 = vmatpush1.bf16.msra.mxu0 %v136
  %160 = vmatprep.subr.bf16.mxu0 0
  %161 = vmatpush1.bf16.msra.mxu0 %v137
  %162 = vmatprep.subr.bf16.mxu0 0
  %163 = vmatpush1.bf16.msra.mxu0 0
  %164 = vmatprep.subr.bf16.mxu0 0
  %165 = vmatpush1.bf16.msra.mxu0 0
  %166 = vmatprep.subr.bf16.mxu0 0
  %167 = vmatpush1.bf16.msra.mxu0 0
  %168 = vmatprep.subr.bf16.mxu0 0
  %169 = vmatpush1.bf16.msra.mxu0 0
  %170 = vmatprep.subr.bf16.mxu0 0
  %171 = vmatpush1.bf16.msra.mxu0 0
  %172 = vmatprep.subr.bf16.mxu0 0
  %173 = vmatpush1.bf16.msra.mxu0 0
  %174 = vmatprep.subr.bf16.mxu0 0
  %175 = vmatpush1.bf16.msra.mxu0 0
  %176 = vmatprep.subr.bf16.mxu0 0
  %177 = vmatpush1.bf16.msra.mxu0 0
  %178 = vmatprep.mubr.bf16.mxu0 0
  %179 = vmatmul.mubr.bf16.gmra.mrb[0].mxu0 %v82
  %v180 = vpop.f32.mrb[0].mxu0
  %v181 = vadd.f32 0.0, %v180
  %v182 = vpop.f32.mrb[0].mxu0
  %v183 = vpop.f32.mrb[0].mxu0
  %v184 = vadd.f32 0.0, %v183
  %v185 = vpop.f32.mrb[0].mxu0
  %186 = vmatprep.mubr.bf16.mxu0 0
  %187 = vmatmul.mubr.bf16.gmra.mrb[0].mxu0 %v83
  %v188 = vpop.f32.mrb[0].mxu0
  %v189 = vadd.f32 0.0, %v188
  %v190 = vpop.f32.mrb[0].mxu0
  %v191 = vpop.f32.mrb[0].mxu0
  %v192 = vadd.f32 0.0, %v191
  %v193 = vpop.f32.mrb[0].mxu0
  %194 = vmatprep.mubr.bf16.mxu0 0
  %195 = vmatmul.mubr.bf16.gmra.mrb[0].mxu0 %v84
  %v196 = vpop.f32.mrb[0].mxu0
  %v197 = vadd.f32 0.0, %v196
  %v198 = vpop.f32.mrb[0].mxu0
  %v199 = vpop.f32.mrb[0].mxu0
  %v200 = vadd.f32 0.0, %v199
  %v201 = vpop.f32.mrb[0].mxu0
  %202 = vmatprep.mubr.bf16.mxu0 0
  %203 = vmatmul.mubr.bf16.gmra.mrb[0].mxu0 %v85
  %v204 = vpop.f32.mrb[0].mxu0
  %v205 = vadd.f32 0.0, %v204
  %v206 = vpop.f32.mrb[0].mxu0
  %v207 = vpop.f32.mrb[0].mxu0
  %v208 = vadd.f32 0.0, %v207
  %v209 = vpop.f32.mrb[0].mxu0
  %210 = vmatprep.mubr.bf16.mxu0 0
  %211 = vmatmul.mubr.bf16.gmra.mrb[0].mxu0 %v86
  %v212 = vpop.f32.mrb[0].mxu0
  %v213 = vadd.f32 0.0, %v212
  %v214 = vpop.f32.mrb[0].mxu0
  %v215 = vpop.f32.mrb[0].mxu0
  %v216 = vadd.f32 0.0, %v215
  %v217 = vpop.f32.mrb[0].mxu0
  %218 = vmatprep.mubr.bf16.mxu0 0
  %219 = vmatmul.mubr.bf16.gmra.mrb[0].mxu0 %v87
  %v220 = vpop.f32.mrb[0].mxu0
  %v221 = vadd.f32 0.0, %v220
  %v222 = vpop.f32.mrb[0].mxu0
  %v223 = vpop.f32.mrb[0].mxu0
  %v224 = vadd.f32 0.0, %v223
  %v225 = vpop.f32.mrb[0].mxu0
  %226 = vmatprep.mubr.bf16.mxu0 0
  %227 = vmatmul.mubr.bf16.gmra.mrb[0].mxu0 %v88
  %v228 = vpop.f32.mrb[0].mxu0
  %v229 = vadd.f32 0.0, %v228
  %v230 = vpop.f32.mrb[0].mxu0
  %v231 = vpop.f32.mrb[0].mxu0
  %v232 = vadd.f32 0.0, %v231
  %v233 = vpop.f32.mrb[0].mxu0
  %234 = vmatprep.mubr.bf16.mxu0 0
  %235 = vmatmul.mubr.bf16.gmra.mrb[0].mxu0 %v89
  %v236 = vpop.f32.mrb[0].mxu0
  %v237 = vadd.f32 0.0, %v236
  %v238 = vpop.f32.mrb[0].mxu0
  %v239 = vpop.f32.mrb[0].mxu0
  %v240 = vadd.f32 0.0, %v239
  %v241 = vpop.f32.mrb[0].mxu0
  %242 = vdwg.mxu0
  %v243 = vld [vmem:[%s2] sm:$0x1]
  %v245 = vlaneseq
  %v246 = vshrl.u32 %v245, 7
  %v247 = vsub.s32 0, %v246
  %v248 = vrot.slane %v243, %v247
  %v250 = vmul.f32 %v181, %v248
  %v251 = vmul.f32 %v184, %v248
  %v252 = vmul.f32 %v189, %v248
  %v253 = vmul.f32 %v192, %v248
  %v254 = vmul.f32 %v197, %v248
  %v255 = vmul.f32 %v200, %v248
  %v256 = vmul.f32 %v205, %v248
  %v257 = vmul.f32 %v208, %v248
  %v258 = vmul.f32 %v213, %v248
  %v259 = vmul.f32 %v216, %v248
  %v260 = vmul.f32 %v221, %v248
  %v261 = vmul.f32 %v224, %v248
  %v262 = vmul.f32 %v229, %v248
  %v263 = vmul.f32 %v232, %v248
  %v264 = vmul.f32 %v237, %v248
  %v265 = vmul.f32 %v240, %v248
  %v266 = vld [vmem:[%s3] sm:$0x1]
  %v268 = vlaneseq
  %v269 = vshrl.u32 %v268, 7
  %v270 = vsub.s32 0, %v269
  %v271 = vrot.slane %v266, %v270
  %v273 = vadd.f32 %v250, %v271
  %v274 = vadd.f32 %v251, %v271
  %v275 = vadd.f32 %v252, %v271
  %v276 = vadd.f32 %v253, %v271
  %v277 = vadd.f32 %v254, %v271
  %v278 = vadd.f32 %v255, %v271
  %v279 = vadd.f32 %v256, %v271
  %v280 = vadd.f32 %v257, %v271
  %v281 = vadd.f32 %v258, %v271
  %v282 = vadd.f32 %v259, %v271
  %v283 = vadd.f32 %v260, %v271
  %v284 = vadd.f32 %v261, %v271
  %v285 = vadd.f32 %v262, %v271
  %v286 = vadd.f32 %v263, %v271
  %v287 = vadd.f32 %v264, %v271
  %v288 = vadd.f32 %v265, %v271
  %v289 = vmax.f32 %v273, 0.0
  %v290 = vmax.f32 %v274, 0.0
  %v291 = vmax.f32 %v275, 0.0
  %v292 = vmax.f32 %v276, 0.0
  %v293 = vmax.f32 %v277, 0.0
  %v294 = vmax.f32 %v278, 0.0
  %v295 = vmax.f32 %v279, 0.0
  %v296 = vmax.f32 %v280, 0.0
  %v297 = vmax.f32 %v281, 0.0
  %v298 = vmax.f32 %v282, 0.0
  %v299 = vmax.f32 %v283, 0.0
  %v300 = vmax.f32 %v284, 0.0
  %v301 = vmax.f32 %v285, 0.0
  %v302 = vmax.f32 %v286, 0.0
  %v303 = vmax.f32 %v287, 0.0
  %v304 = vmax.f32 %v288, 0.0
  %vm305 = vcmask 64512
  %306 = vst.msk [vmem:[%s4] sm:$0xff] %vm305, %v289
  %307 = vst.msk [vmem:[%s4 + $0x8] sm:$0xff] %vm305, %v290
  %308 = vst.msk [vmem:[%s4 + $0x10] sm:$0xff] %vm305, %v291
  %309 = vst.msk [vmem:[%s4 + $0x18] sm:$0xff] %vm305, %v292
  %310 = vst.msk [vmem:[%s4 + $0x20] sm:$0xff] %vm305, %v293
  %311 = vst.msk [vmem:[%s4 + $0x28] sm:$0xff] %vm305, %v294
  %312 = vst.msk [vmem:[%s4 + $0x30] sm:$0xff] %vm305, %v295
  %313 = vst.msk [vmem:[%s4 + $0x38] sm:$0xff] %vm305, %v296
  %314 = vst.msk [vmem:[%s4 + $0x40] sm:$0xff] %vm305, %v297
  %315 = vst.msk [vmem:[%s4 + $0x48] sm:$0xff] %vm305, %v298
  %316 = vst.msk [vmem:[%s4 + $0x50] sm:$0xff] %vm305, %v299
  %317 = vst.msk [vmem:[%s4 + $0x58] sm:$0xff] %vm305, %v300
  %318 = vst.msk [vmem:[%s4 + $0x60] sm:$0xff] %vm305, %v301
  %319 = vst.msk [vmem:[%s4 + $0x68] sm:$0xff] %vm305, %v302
  %320 = vst.msk [vmem:[%s4 + $0x70] sm:$0xff] %vm305, %v303
  %321 = vst.msk [vmem:[%s4 + $0x78] sm:$0xff] %vm305, %v304
  // Predicated region
  $region18: #{tpu_custom_call.1} parent=0 // pred_check
    _
  $region19: #{tpu_custom_call.1} parent=0 // pred_check_branch
    %323 = sbr.rel (0) target = $region21
  $region20: #{tpu_custom_call.1} parent=0 // pred_region
    _
  $region21: #{tpu_custom_call.1} parent=0 // pred_fallthru
    _
  // Predicated region
  $region22: #{tpu_custom_call.1} parent=0 // pred_check
    _
  $region23: #{tpu_custom_call.1} parent=0 // pred_check_branch
    %325 = sbr.rel (0) target = $region25
  $region24: #{tpu_custom_call.1} parent=0 // pred_region
    _
  $region25: #{tpu_custom_call.1} parent=0 // pred_fallthru
    _

</llo_original>
